<compile_context>
chip_gen: v7x
topology: tpu7x:2x2x1
jax: 0.10.0
libtpu: 0.0.40
codegen_flags: <defaults>
</compile_context>

<pallas_src>
import functools

import jax
import jax.numpy as jnp
import numpy as np
from jax.experimental import pallas as pl
from jax.experimental.pallas import tpu as pltpu


# ----------------------------- Pallas kernel -------------------------------

def fused_image_encoder_kernel(
    rgb_ref,      # (tb, RGB_FEAT)                image embeddings (batch block)
    depth_ref,    # (tb, tk)                      flattened depth features (K block)
    w_dl_ref,     # (tk, DEPTH_FEAT)        bf16  depth_linear weight (K block, pre-transposed)
    b_dl_ref,     # (1, DEPTH_FEAT)         f32   depth_linear bias (+ folded spatial term)
    w_cat_ref,    # (RGB_FEAT+DEPTH_FEAT, PROJ) bf16  [w_img ; w_dep] packed, pre-transposed
    ln_ref,       # (3, PROJ)               f32   [b_img+b_dep ; ln_gamma ; ln_beta]
    out_ref,      # (tb, PROJ)              f32
    acc_ref,      # (tb, DEPTH_FEAT)        f32   depth_linear accumulator
):
    k = pl.program_id(1)
    nk = pl.num_programs(1)
    rgb_feat = rgb_ref.shape[1]

    @pl.when(k == 0)
    def _prologue():
        # depth_linear accumulator starts at its bias (incl. folded spatial term).
        acc_ref[...] = jnp.broadcast_to(b_dl_ref[...], acc_ref.shape)
        # Hoist the rgb projection (and both linear biases) off the
        # pipeline-drain step: the output block is resident across the K axis,
        # so park the partial result there.
        im = jnp.dot(rgb_ref[...].astype(w_cat_ref.dtype),
                     w_cat_ref[0:rgb_feat, :],
                     preferred_element_type=jnp.float32)
        out_ref[...] = im + ln_ref[0:1, :]

    # depth_linear partial product for this K tile (bf16 MXU, f32 accumulation).
    acc_ref[...] += jnp.dot(depth_ref[...].astype(w_dl_ref.dtype), w_dl_ref[...],
                            preferred_element_type=jnp.float32)

    @pl.when(k == nk - 1)
    def _epilogue():
        d1 = jnp.maximum(acc_ref[...], 0.0)              # ReLU (bias already in acc)
        dm = jnp.dot(d1.astype(w_cat_ref.dtype),
                     w_cat_ref[rgb_feat:, :],
                     preferred_element_type=jnp.float32)
        s = out_ref[...] + dm                            # img_map + depth_map (+ biases)

        # img_mod == 'cls': LayerNorm over last dim (f32 statistics)
        mean = jnp.mean(s, axis=-1, keepdims=True)
        var = jnp.mean((s - mean) ** 2, axis=-1, keepdims=True)
        normed = (s - mean) * jax.lax.rsqrt(var + 1e-5)
        out_ref[...] = (normed * ln_ref[1:2, :] + ln_ref[2:3, :]).astype(out_ref.dtype)


# --------------------------- Param preparation -------------------------------

def prepare_params(params, depth_shape, compute_dtype=jnp.bfloat16, k_align=256):
    """One-time: fold the spatial-embedding term into the depth_linear bias,
    pad/transpose weights to (K_pad, out), pack the two projection weights,
    cast matmul weights to bf16, pack LN vectors + combined biases."""
    C, H, W = depth_shape
    k_depth = C * H * W

    w_dl = params["depth_linear_w"].astype(jnp.float32)      # (DEPTH_FEAT, (C+E)*H*W)
    w_dl_depth = w_dl[:, :k_depth]                            # depth columns
    w_dl_spatial = w_dl[:, k_depth:]                          # spatial-embedding columns

    # spatial_embeddings(arange(H*W)).view(1, E, H, W).flatten() == raw view order
    spatial_flat = params["spatial_emb"].reshape(-1).astype(jnp.float32)   # (E*H*W,)
    spatial_bias = w_dl_spatial @ spatial_flat                 # (DEPTH_FEAT,) constant

    # Pad K to a lane-aligned multiple (zeros) so K tiles are always (8,128)-aligned.
    k_pad = ((k_depth + k_align - 1) // k_align) * k_align
    w_dl_t = jnp.zeros((k_pad, w_dl.shape[0]), jnp.float32).at[:k_depth].set(w_dl_depth.T)

    # Pack img/depth projection weights -> one resident bf16 ref in the kernel.
    w_cat = jnp.concatenate(
        [params["img_lin_w"].astype(jnp.float32).T,
         params["depth_lin_w"].astype(jnp.float32).T], axis=0)  # (RGB_FEAT+DEPTH_FEAT, PROJ)

    ln_pack = jnp.stack([
        params["img_lin_b"] + params["depth_lin_b"],             # combined linear biases
        params["ln_gamma"],
        params["ln_beta"],
    ]).astype(jnp.float32)                                       # (3, PROJ)

    return {
        "w_dl": jnp.asarray(w_dl_t, compute_dtype),              # (K_pad, DEPTH_FEAT)
        "b_dl": (params["depth_linear_b"].astype(jnp.float32)
                 + spatial_bias)[None, :],                       # (1, DEPTH_FEAT)
        "w_cat": jnp.asarray(w_cat, compute_dtype),              # (RGB+DEPTH, PROJ)
        "ln_pack": ln_pack,                                      # (3, PROJ)
    }


# ------------------------- VMEM budget / tile choice -------------------------

def _tpu_vmem_capacity_bytes():
    try:
        return int(pltpu.get_tpu_info().vmem_capacity_bytes)
    except Exception:
        return 64 * 1024 * 1024        # conservative: v7x per-TensorCore VMEM


def _vmem_bytes(tb, tk, nk, rgb_feat, depth_feat, proj, act_bytes):
    """Rough VMEM footprint for one tile choice (double-buffered inputs/output)."""
    fixed = (2 * (rgb_feat + depth_feat) * proj * 2     # w_cat (bf16, double-buffered)
             + 2 * 8 * depth_feat * 4                   # b_dl   (sublane-padded)
             + 2 * 8 * proj * 4)                        # ln_pack (sublane-padded)
    var = (2 * tb * rgb_feat * act_bytes                # rgb block
           + 2 * tb * tk * act_bytes                    # depth block
           + (1 if nk == 1 else 2) * tk * depth_feat * 2  # w_dl (resident if nk == 1)
           + 2 * tb * proj * 4                          # output block
           + tb * depth_feat * 4)                       # f32 accumulator scratch
    return fixed + var


def _choose_tiles(B, K, rgb_feat, depth_feat, proj, act_bytes, budget):
    tb_cands = [t for t in (512, 256, 128, 64, 32, 16, 8) if B % t == 0] or [B]
    # Keep >= 2 batch blocks when possible so both v7x TensorCores get work.
    pref_tb = [t for t in tb_cands if B // t >= 2] or tb_cands

    # 1) Weight-resident path: nk == 1 -> w_dl read from HBM exactly once.
    for tb in pref_tb:
        if _vmem_bytes(tb, K, 1, rgb_feat, depth_feat, proj, act_bytes) <= budget:
            return tb, K
    # 2) K-tiled path: biggest batch tile first (minimizes weight re-streams),
    #    with the biggest 256-multiple K tile that fits.
    tk_cands = [t for t in (4096, 2048, 1024, 512, 256) if K % t == 0] or [K]
    for tb in pref_tb:
        for tk in tk_cands:
            if _vmem_bytes(tb, tk, K // tk, rgb_feat, depth_feat, proj,
                           act_bytes) <= budget:
                return tb, tk
    # 3) Last resort: smallest tiles.
    return tb_cands[-1], tk_cands[-1]


# ------------------------------ Wrapper -------------------------------------

@functools.partial(jax.jit, static_argnames=("tile_override",))
def image_encoder_forward(rgb_inputs, depth_inputs, prep, tile_override=None):
    """Pallas-backed ImageEncoder.forward(rgb, depth) with fc=False,
    do_process=False, do_embeds=False, img_mod='cls' (eval mode)."""
    B = rgb_inputs.shape[0]
    C, H, W = depth_inputs.shape[1:]
    K = C * H * W
    K_pad = prep["w_dl"].shape[0]
    RGB_FEAT = rgb_inputs.shape[1]
    DEPTH_FEAT = prep["w_dl"].shape[1]
    PROJ = prep["w_cat"].shape[1]

    depth_flat = depth_inputs.reshape(B, K)
    if K != K_pad:        # zero-pad to the lane-aligned K the prepared weight uses
        depth_flat = jnp.pad(depth_flat, ((0, 0), (0, K_pad - K)))

    act_bytes = max(jnp.dtype(rgb_inputs.dtype).itemsize,
                    jnp.dtype(depth_flat.dtype).itemsize)
    capacity = _tpu_vmem_capacity_bytes()
    budget = capacity // 2                    # headroom for compiler scratch

    if tile_override is not None:
        tb, tk = tile_override
    else:
        tb, tk = _choose_tiles(B, K_pad, RGB_FEAT, DEPTH_FEAT, PROJ, act_bytes, budget)
    nb, nk = B // tb, K_pad // tk

    need = _vmem_bytes(tb, tk, nk, RGB_FEAT, DEPTH_FEAT, PROJ, act_bytes)
    vmem_limit = int(min(capacity * 0.85, max(need + (8 << 20), 32 << 20)))

    flops = 2 * B * (K_pad * DEPTH_FEAT + (RGB_FEAT + DEPTH_FEAT) * PROJ)
    w_dl_bytes = prep["w_dl"].size * 2 * (nb if nk > 1 else 1)   # re-streamed per batch block if tiled
    bytes_accessed = (
        rgb_inputs.size * jnp.dtype(rgb_inputs.dtype).itemsize
        + depth_flat.size * jnp.dtype(depth_flat.dtype).itemsize
        + w_dl_bytes + prep["w_cat"].size * 2
        + prep["b_dl"].size * 4 + prep["ln_pack"].size * 4
        + B * PROJ * 4)

    out = pl.pallas_call(
        fused_image_encoder_kernel,
        out_shape=jax.ShapeDtypeStruct((B, PROJ), jnp.float32),
        grid_spec=pltpu.PrefetchScalarGridSpec(
            num_scalar_prefetch=0,
            grid=(nb, nk),
            in_specs=[
                pl.BlockSpec((tb, RGB_FEAT),               lambda i, k: (i, 0)),
                pl.BlockSpec((tb, tk),                     lambda i, k: (i, k)),
                pl.BlockSpec((tk, DEPTH_FEAT),             lambda i, k: (k, 0)),
                pl.BlockSpec((1, DEPTH_FEAT),              lambda i, k: (0, 0)),
                pl.BlockSpec((RGB_FEAT + DEPTH_FEAT, PROJ), lambda i, k: (0, 0)),
                pl.BlockSpec((3, PROJ),                    lambda i, k: (0, 0)),
            ],
            out_specs=pl.BlockSpec((tb, PROJ), lambda i, k: (i, 0)),
            scratch_shapes=[pltpu.VMEM((tb, DEPTH_FEAT), jnp.float32)],
        ),
        compiler_params=pltpu.CompilerParams(
            dimension_semantics=("parallel", "arbitrary"),
            vmem_limit_bytes=vmem_limit),
        cost_estimate=pl.CostEstimate(
            flops=flops, transcendentals=B, bytes_accessed=int(bytes_accessed)),
    )(rgb_inputs, depth_flat, prep["w_dl"], prep["b_dl"],
      prep["w_cat"], prep["ln_pack"])

    # return img_depth_embeds.unsqueeze(1)
    return out[:, None, :]


# --------------------------- References (plain JAX) ---------------------------

def image_encoder_forward_ref_f32(rgb_inputs, depth_inputs, params):
    """Original-module semantics, full f32 (spatial concat not folded)."""
    B = rgb_inputs.shape[0]
    C, H, W = depth_inputs.shape[1:]
    E = params["spatial_emb"].shape[1]
    spatial = jnp.broadcast_to(params["spatial_emb"].reshape(1, E, H, W), (B, E, H, W))
    depth_flat = jnp.concatenate([depth_inputs, spatial], axis=1).reshape(B, -1)

    d1 = jnp.maximum(depth_flat @ params["depth_linear_w"].T + params["depth_linear_b"], 0.0)
    im = rgb_inputs @ params["img_lin_w"].T + params["img_lin_b"]
    dm = d1 @ params["depth_lin_w"].T + params["depth_lin_b"]
    s = im + dm
    mean = s.mean(-1, keepdims=True)
    var = ((s - mean) ** 2).mean(-1, keepdims=True)
    normed = (s - mean) / jnp.sqrt(var + 1e-5)
    return (normed * params["ln_gamma"] + params["ln_beta"])[:, None, :]


def image_encoder_forward_ref_prepared(rgb_inputs, depth_inputs, prep):
    """Same math as the kernel (folded/padded weights, bf16 matmuls, f32 accum)."""
    B = rgb_inputs.shape[0]
    K = int(np.prod(depth_inputs.shape[1:]))
    K_pad = prep["w_dl"].shape[0]
    rgb_feat = rgb_inputs.shape[1]
    depth_flat = depth_inputs.reshape(B, K)
    if K != K_pad:
        depth_flat = jnp.pad(depth_flat, ((0, 0), (0, K_pad - K)))

    acc = jnp.dot(depth_flat.astype(prep["w_dl"].dtype), prep["w_dl"],
                  preferred_element_type=jnp.float32) + prep["b_dl"]
    d1 = jnp.maximum(acc, 0.0)
    im = jnp.dot(rgb_inputs.astype(prep["w_cat"].dtype), prep["w_cat"][:rgb_feat],
                 preferred_element_type=jnp.float32)
    dm = jnp.dot(d1.astype(prep["w_cat"].dtype), prep["w_cat"][rgb_feat:],
                 preferred_element_type=jnp.float32)
    s = im + dm + prep["ln_pack"][0:1, :]
    mean = s.mean(-1, keepdims=True)
    var = ((s - mean) ** 2).mean(-1, keepdims=True)
    normed = (s - mean) / jnp.sqrt(var + 1e-5)
    return (normed * prep["ln_pack"][1:2, :] + prep["ln_pack"][2:3, :])[:, None, :]


# --------------------------------- Main --------------------------------------

if __name__ == "__main__":
    # Small synthetic configuration (ImageEncoderCfg stand-in):
    #   rgb.feature_dim = 128, rgb.projection_dim = 128, depth.feature_dim = 128
    #   depth_encoder.output_shape = (C+E, H, W) = (20, 8, 8) -> DEPTH_FLAT = 1280
    #   depth-only K = C*H*W = 1024 (256-aligned). B = 16 so the batch axis
    #   splits into >= 2 "parallel" blocks (both v7x TensorCores used).
    B = 16
    RGB_FEAT = 128
    PROJ = 128
    DEPTH_FEAT = 128
    C, E, H, W = 16, 4, 8, 8
    DEPTH_FLAT = (C + E) * H * W

    key = jax.random.PRNGKey(0)
    keys = jax.random.split(key, 10)

    params = {
        # depth_encoder spatial_embeddings: nn.Embedding(H*W, E).weight
        "spatial_emb": jax.random.normal(keys[0], (H * W, E), jnp.float32) * 0.02,
        # depth_linear: nn.Linear(DEPTH_FLAT, DEPTH_FEAT)
        "depth_linear_w": jax.random.normal(keys[1], (DEPTH_FEAT, DEPTH_FLAT), jnp.float32) * 0.05,
        "depth_linear_b": jax.random.normal(keys[2], (DEPTH_FEAT,), jnp.float32) * 0.01,
        # img_learnable_linear: nn.Linear(RGB_FEAT, PROJ)
        "img_lin_w": jax.random.normal(keys[3], (PROJ, RGB_FEAT), jnp.float32) * 0.05,
        "img_lin_b": jax.random.normal(keys[4], (PROJ,), jnp.float32) * 0.01,
        # depth_learnable_linear: nn.Linear(DEPTH_FEAT, PROJ)
        "depth_lin_w": jax.random.normal(keys[5], (PROJ, DEPTH_FEAT), jnp.float32) * 0.05,
        "depth_lin_b": jax.random.normal(keys[6], (PROJ,), jnp.float32) * 0.01,
        # layernorm(PROJ)
        "ln_gamma": jnp.ones((PROJ,), jnp.float32),
        "ln_beta": jnp.zeros((PROJ,), jnp.float32),
    }

    # Inputs: precomputed image embeddings (B, RGB_FEAT) and depth features (B, C, H, W) NCHW.
    rgb_inputs = jax.random.normal(keys[7], (B, RGB_FEAT), jnp.float32)
    depth_inputs = jax.random.normal(keys[8], (B, C, H, W), jnp.float32)

    # One-time weight preparation (fold spatial term, pad K, transpose, bf16 cast, pack).
    prep = prepare_params(params, (C, H, W), compute_dtype=jnp.bfloat16)

    ref_prep = image_encoder_forward_ref_prepared(rgb_inputs, depth_inputs, prep)
    ref_f32 = image_encoder_forward_ref_f32(rgb_inputs, depth_inputs, params)

    # 1) Auto-tiled call: at these sizes the whole depth_linear weight is VMEM
    #    resident (nk == 1) and the batch splits into 2 "parallel" blocks.
    out = image_encoder_forward(rgb_inputs, depth_inputs, prep)
    out = jax.block_until_ready(out)
    assert out.shape == (B, 1, PROJ)
    np.testing.assert_allclose(np.asarray(out), np.asarray(ref_prep), atol=5e-3, rtol=5e-3)
    np.testing.assert_allclose(np.asarray(out), np.asarray(ref_f32), atol=0.1, rtol=0.1)

    # 2) Forced K-tiled path (nb=2, nk=4) to exercise the accumulator /
    #    prologue-hoist / epilogue across multiple K grid steps.
    out_tiled = image_encoder_forward(rgb_inputs, depth_inputs, prep, tile_override=(8, 256))
    out_tiled = jax.block_until_ready(out_tiled)
    np.testing.assert_allclose(np.asarray(out_tiled), np.asarray(ref_prep), atol=5e-3, rtol=5e-3)
    np.testing.assert_allclose(np.asarray(out_tiled), np.asarray(ref_f32), atol=0.1, rtol=0.1)

    # TODO(synk): CLIP vision transformer / ResNet depth backbone (do_process /
    # do_embeds paths) are external pretrained submodules and are not part of
    # this fused kernel.
    print("KERNEL_OK")
</pallas_src>

<mosaic_0001>
module attributes {stable_mosaic.version = 11 : i64} {
  func.func @fused_image_encoder_kernel(%arg0: i32, %arg1: i32, %arg2: memref<8x128xf32, #tpu.memory_space<vmem>>, %arg3: memref<8x1024xf32, #tpu.memory_space<vmem>>, %arg4: memref<1024x128xbf16, #tpu.memory_space<vmem>>, %arg5: memref<1x128xf32, #tpu.memory_space<vmem>>, %arg6: memref<256x128xbf16, #tpu.memory_space<vmem>>, %arg7: memref<3x128xf32, #tpu.memory_space<vmem>>, %arg8: memref<8x128xf32, #tpu.memory_space<vmem>>, %arg9: memref<8x128xf32, #tpu.memory_space<vmem>>) attributes {dimension_semantics = [#tpu.dimension_semantics<parallel>, #tpu.dimension_semantics<arbitrary>], iteration_bounds = array<i64: 2, 1>, scalar_prefetch = 0 : i64, scratch_operands = 1 : i64, tpu.core_type = #tpu.core_type<tc>, window_params = [{transform_indices = @transform_0, window_bounds = array<i64: 8, 128>}, {transform_indices = @transform_1, window_bounds = array<i64: 8, 1024>}, {transform_indices = @transform_2, window_bounds = array<i64: 1024, 128>}, {pipeline_mode = #tpu.pipeline_mode<synchronous>, transform_indices = @transform_3, window_bounds = array<i64: 1, 128>}, {pipeline_mode = #tpu.pipeline_mode<synchronous>, transform_indices = @transform_4, window_bounds = array<i64: 256, 128>}, {pipeline_mode = #tpu.pipeline_mode<synchronous>, transform_indices = @transform_5, window_bounds = array<i64: 3, 128>}, {transform_indices = @transform_6, window_bounds = array<i64: 8, 128>}]} {
    %c0_i32 = arith.constant 0 : i32
    %0 = arith.cmpi eq, %arg1, %c0_i32 : i32
    %1 = arith.extui %0 : i1 to i32
    %c0_i32_0 = arith.constant 0 : i32
    %2 = arith.cmpi ne, %1, %c0_i32_0 : i32
    scf.if %2 {
      %c0_10 = arith.constant 0 : index
      %c0_11 = arith.constant 0 : index
      %13 = vector.load %arg5[%c0_10, %c0_11] : memref<1x128xf32, #tpu.memory_space<vmem>>, vector<1x128xf32>
      %14 = vector.shape_cast %13 : vector<1x128xf32> to vector<1x128xf32>
      %15 = vector.broadcast %14 : vector<1x128xf32> to vector<8x128xf32>
      %c0_12 = arith.constant 0 : index
      %c0_13 = arith.constant 0 : index
      %16 = vector.load %arg9[%c0_12, %c0_13] : memref<8x128xf32, #tpu.memory_space<vmem>>, vector<8x128xf32>
      tpu.vector_store %arg9[%c0_12, %c0_13], %15 {strides = array<i32>} : memref<8x128xf32, #tpu.memory_space<vmem>>, vector<8x128xf32>,
      %c0_14 = arith.constant 0 : index
      %c0_15 = arith.constant 0 : index
      %17 = vector.load %arg2[%c0_14, %c0_15] : memref<8x128xf32, #tpu.memory_space<vmem>>, vector<8x128xf32>
      %18 = arith.truncf %17 : vector<8x128xf32> to vector<8x128xbf16>
      %c0_16 = arith.constant 0 : index
      %c0_17 = arith.constant 0 : index
      %19 = vector.load %arg6[%c0_16, %c0_17] : memref<256x128xbf16, #tpu.memory_space<vmem>>, vector<128x128xbf16>
      %cst_18 = arith.constant dense<0.000000e+00> : vector<8x128xf32>
      %20 = tpu.matmul %18, %19, %cst_18 {dimension_numbers = #tpu.dot_dimension_numbers<[1], [0], [0], [1], [0, 0, 1, 1], [], []>} : vector<8x128xbf16>, vector<128x128xbf16>, vector<8x128xf32> -> vector<8x128xf32>
      %c0_19 = arith.constant 0 : index
      %c0_20 = arith.constant 0 : index
      %21 = vector.load %arg7[%c0_19, %c0_20] : memref<3x128xf32, #tpu.memory_space<vmem>>, vector<1x128xf32>
      %22 = vector.broadcast %21 : vector<1x128xf32> to vector<8x128xf32>
      %23 = arith.addf %20, %22 : vector<8x128xf32>
      %c0_21 = arith.constant 0 : index
      %c0_22 = arith.constant 0 : index
      %24 = vector.load %arg8[%c0_21, %c0_22] : memref<8x128xf32, #tpu.memory_space<vmem>>, vector<8x128xf32>
      tpu.vector_store %arg8[%c0_21, %c0_22], %23 {strides = array<i32>} : memref<8x128xf32, #tpu.memory_space<vmem>>, vector<8x128xf32>,
    } else {
    }
    %c0 = arith.constant 0 : index
    %c0_1 = arith.constant 0 : index
    %3 = vector.load %arg9[%c0, %c0_1] : memref<8x128xf32, #tpu.memory_space<vmem>>, vector<8x128xf32>
    %c0_2 = arith.constant 0 : index
    %c0_3 = arith.constant 0 : index
    %4 = vector.load %arg3[%c0_2, %c0_3] : memref<8x1024xf32, #tpu.memory_space<vmem>>, vector<8x1024xf32>
    %5 = arith.truncf %4 : vector<8x1024xf32> to vector<8x1024xbf16>
    %c0_4 = arith.constant 0 : index
    %c0_5 = arith.constant 0 : index
    %6 = vector.load %arg4[%c0_4, %c0_5] : memref<1024x128xbf16, #tpu.memory_space<vmem>>, vector<1024x128xbf16>
    %cst = arith.constant dense<0.000000e+00> : vector<8x128xf32>
    %7 = tpu.matmul %5, %6, %cst {dimension_numbers = #tpu.dot_dimension_numbers<[1], [0], [0], [1], [0, 0, 1, 1], [], []>} : vector<8x1024xbf16>, vector<1024x128xbf16>, vector<8x128xf32> -> vector<8x128xf32>
    %8 = arith.addf %3, %7 : vector<8x128xf32>
    %c0_6 = arith.constant 0 : index
    %c0_7 = arith.constant 0 : index
    %9 = vector.load %arg9[%c0_6, %c0_7] : memref<8x128xf32, #tpu.memory_space<vmem>>, vector<8x128xf32>
    tpu.vector_store %arg9[%c0_6, %c0_7], %8 {strides = array<i32>} : memref<8x128xf32, #tpu.memory_space<vmem>>, vector<8x128xf32>,
    %c0_i32_8 = arith.constant 0 : i32
    %10 = arith.cmpi eq, %arg1, %c0_i32_8 : i32
    %11 = arith.extui %10 : i1 to i32
    %c0_i32_9 = arith.constant 0 : i32
    %12 = arith.cmpi ne, %11, %c0_i32_9 : i32
    scf.if %12 {
      %c0_10 = arith.constant 0 : index
      %c0_11 = arith.constant 0 : index
      %13 = vector.load %arg9[%c0_10, %c0_11] : memref<8x128xf32, #tpu.memory_space<vmem>>, vector<8x128xf32>
      %cst_12 = arith.constant 0.000000e+00 : f32
      %14 = vector.broadcast %cst_12 : f32 to vector<8x128xf32>
      %15 = arith.maximumf %13, %14 : vector<8x128xf32>
      %16 = arith.truncf %15 : vector<8x128xf32> to vector<8x128xbf16>
      %c128 = arith.constant 128 : index
      %c0_13 = arith.constant 0 : index
      %17 = vector.load %arg6[%c128, %c0_13] : memref<256x128xbf16, #tpu.memory_space<vmem>>, vector<128x128xbf16>
      %cst_14 = arith.constant dense<0.000000e+00> : vector<8x128xf32>
      %18 = tpu.matmul %16, %17, %cst_14 {dimension_numbers = #tpu.dot_dimension_numbers<[1], [0], [0], [1], [0, 0, 1, 1], [], []>} : vector<8x128xbf16>, vector<128x128xbf16>, vector<8x128xf32> -> vector<8x128xf32>
      %c0_15 = arith.constant 0 : index
      %c0_16 = arith.constant 0 : index
      %19 = vector.load %arg8[%c0_15, %c0_16] : memref<8x128xf32, #tpu.memory_space<vmem>>, vector<8x128xf32>
      %20 = arith.addf %19, %18 : vector<8x128xf32>
      %cst_17 = arith.constant dense<0.000000e+00> : vector<8xf32>
      %21 = vector.multi_reduction <add>, %20, %cst_17 [1] : vector<8x128xf32> to vector<8xf32>
      %22 = vector.shape_cast %21 : vector<8xf32> to vector<8x1xf32>
      %cst_18 = arith.constant 1.280000e+02 : f32
      %23 = vector.broadcast %cst_18 : f32 to vector<8x1xf32>
      %24 = arith.divf %22, %23 : vector<8x1xf32>
      %25 = vector.broadcast %24 : vector<8x1xf32> to vector<8x128xf32>
      %26 = arith.subf %20, %25 : vector<8x128xf32>
      %27 = arith.mulf %26, %26 : vector<8x128xf32>
      %cst_19 = arith.constant dense<0.000000e+00> : vector<8xf32>
      %28 = vector.multi_reduction <add>, %27, %cst_19 [1] : vector<8x128xf32> to vector<8xf32>
      %29 = vector.shape_cast %28 : vector<8xf32> to vector<8x1xf32>
      %cst_20 = arith.constant 1.280000e+02 : f32
      %30 = vector.broadcast %cst_20 : f32 to vector<8x1xf32>
      %31 = arith.divf %29, %30 : vector<8x1xf32>
      %32 = vector.broadcast %24 : vector<8x1xf32> to vector<8x128xf32>
      %33 = arith.subf %20, %32 : vector<8x128xf32>
      %cst_21 = arith.constant 9.99999974E-6 : f32
      %34 = vector.broadcast %cst_21 : f32 to vector<8x1xf32>
      %35 = arith.addf %31, %34 : vector<8x1xf32>
      %36 = math.rsqrt %35 : vector<8x1xf32>
      %37 = vector.broadcast %36 : vector<8x1xf32> to vector<8x128xf32>
      %38 = arith.mulf %33, %37 : vector<8x128xf32>
      %c1 = arith.constant 1 : index
      %c0_22 = arith.constant 0 : index
      %39 = vector.load %arg7[%c1, %c0_22] : memref<3x128xf32, #tpu.memory_space<vmem>>, vector<1x128xf32>
      %40 = vector.broadcast %39 : vector<1x128xf32> to vector<8x128xf32>
      %41 = arith.mulf %38, %40 : vector<8x128xf32>
      %c2 = arith.constant 2 : index
      %c0_23 = arith.constant 0 : index
      %42 = vector.load %arg7[%c2, %c0_23] : memref<3x128xf32, #tpu.memory_space<vmem>>, vector<1x128xf32>
      %43 = vector.broadcast %42 : vector<1x128xf32> to vector<8x128xf32>
      %44 = arith.addf %41, %43 : vector<8x128xf32>
      %c0_24 = arith.constant 0 : index
      %c0_25 = arith.constant 0 : index
      %45 = vector.load %arg8[%c0_24, %c0_25] : memref<8x128xf32, #tpu.memory_space<vmem>>, vector<8x128xf32>
      tpu.vector_store %arg8[%c0_24, %c0_25], %44 {strides = array<i32>} : memref<8x128xf32, #tpu.memory_space<vmem>>, vector<8x128xf32>,
    } else {
    }
    return
  }
  func.func @transform_0(%arg0: i32, %arg1: i32) -> (i32, i32) {
    %c0_i32 = arith.constant 0 : i32
    %c0_i32_0 = arith.constant 0 : i32
    return %arg0, %c0_i32 : i32, i32
  }
  func.func @transform_1(%arg0: i32, %arg1: i32) -> (i32, i32) {
    %c0_i32 = arith.constant 0 : i32
    return %arg0, %arg1 : i32, i32
  }
  func.func @transform_2(%arg0: i32, %arg1: i32) -> (i32, i32) {
    %c0_i32 = arith.constant 0 : i32
    %c0_i32_0 = arith.constant 0 : i32
    return %arg1, %c0_i32 : i32, i32
  }
  func.func @transform_3(%arg0: i32, %arg1: i32) -> (i32, i32) {
    %c0_i32 = arith.constant 0 : i32
    %c0_i32_0 = arith.constant 0 : i32
    %c0_i32_1 = arith.constant 0 : i32
    return %c0_i32, %c0_i32_0 : i32, i32
  }
  func.func @transform_4(%arg0: i32, %arg1: i32) -> (i32, i32) {
    %c0_i32 = arith.constant 0 : i32
    %c0_i32_0 = arith.constant 0 : i32
    %c0_i32_1 = arith.constant 0 : i32
    return %c0_i32, %c0_i32_0 : i32, i32
  }
  func.func @transform_5(%arg0: i32, %arg1: i32) -> (i32, i32) {
    %c0_i32 = arith.constant 0 : i32
    %c0_i32_0 = arith.constant 0 : i32
    %c0_i32_1 = arith.constant 0 : i32
    return %c0_i32, %c0_i32_0 : i32, i32
  }
  func.func @transform_6(%arg0: i32, %arg1: i32) -> (i32, i32) {
    %c0_i32 = arith.constant 0 : i32
    %c0_i32_0 = arith.constant 0 : i32
    return %arg0, %c0_i32 : i32, i32
  }
}

</mosaic_0001>

<llo_original>
// kernel: image_encoder_forward.1
$region0: #{image_encoder_forward.1}
  #allocation0 [shape = 'u32[]', space=smem, size = 0x4, offset = 0x4, fixed_abs, tag = 'smem constant byte address 0x4 - core index']
  #allocation1 [shape = 'u32[144,128]{1,0:T(1,128)}', space=vmem, size = 0x12000, scoped, tag = 'internal scratch']
  #allocation2 [shape = 'f32[8,128]{1,0:T(8,128)}', space=vmem, size = 0x1000, scoped, tag = 'scratch operand']
  %s0 = inlined_call_operand.vmem [shape: f32[16,128], index: 0, kind: input, shape index: {}]
  %s1 = inlined_call_operand.vmem [shape: f32[16,1024], index: 1, kind: input, shape index: {}]
  %s2 = inlined_call_operand.vmem [shape: bf16[1024,128], index: 2, kind: input, shape index: {}]
  %s3 = inlined_call_operand.vmem [shape: f32[1,128], index: 3, kind: input, shape index: {}]
  %s4 = inlined_call_operand.vmem [shape: bf16[256,128], index: 4, kind: input, shape index: {}]
  %s5 = inlined_call_operand.vmem [shape: f32[3,128], index: 5, kind: input, shape index: {}]
  %s6 = inlined_call_operand.hbm [shape: f32[16,128], index: 6, kind: output, shape index: {}]
  %s7 = sld [smem:[#allocation0]]
  $region65: #{image_encoder_forward.1} parent=0
    _
  %s9 = ssub.s32 1, %s7
  %s10 = scalar_select 0, %s9, %s7
  $region1: #{image_encoder_forward.1} parent=0
    #allocation3 [shape = 'u8[8192]{0}', space=vmem, size = 0x2000, scoped, tag = 'output window, operand 0']
    #allocation4 [shape = 's32[2]{0}', space=sflag, size = 0x8, scoped, tag = 'scoped memory for image_encoder_forward.1']
    %11 = vsyncpa [#allocation4], 0
    %s12 = scalar_lea.sflag [#allocation4], 1
    %13 = vsyncpa %s12, 0
    loop: start=0, step=1, limit=4
    $region2: #{image_encoder_forward.1} parent=1 // loop_pre_header
      _
    $region3: #{image_encoder_forward.1} parent=1 // loop_header
      %s15 = sphi 0, %s19
      %p16 = scmp.ge.s32.totalorder %s15, 4
      %s22 = sphi 0, %s34
      %s23 = sphi 0, %s30
      %s24 = sphi 0, %s22
      %s25 = sphi 0, %s23
      %s26 = sphi 0, %s24
      %s27 = sphi 0, %s25
      %s37 = sphi 0, %s39
      %s40 = sphi 0, %s37
      %s41 = sphi 0, %s40
      %s57 = sphi 0, %s41
      %s65 = sphi 0, %s67
      %s68 = sphi 0, %s65
      %s69 = sphi 0, %s68
      %s85 = sphi 0, %s69
      %s91 = sphi 0, %s93
      %s94 = sphi 0, %s91
      %s95 = sphi 0, %s94
      %s111 = sphi 0, %s95
      %s115 = sphi 0, %s115
      %s117 = sphi 0, %s115
      %s118 = sphi 0, %s117
      %s132 = sphi 0, %s118
      %s136 = sphi 0, %s136
      %s138 = sphi 0, %s136
      %s139 = sphi 0, %s138
      %s153 = sphi 0, %s139
      %s157 = sphi 0, %s157
      %s159 = sphi 0, %s157
      %s160 = sphi 0, %s159
      %s174 = sphi 0, %s160
      %s180 = sphi 0, %s182
      %s183 = sphi 0, %s180
      %s184 = sphi 0, %s183
      %s200 = sphi 0, %s184
    $region4: #{image_encoder_forward.1} parent=1 // loop_header_branch
      %18 = sbr.rel (%p16) target = $region8
    $region5: #{image_encoder_forward.1} parent=1 // loop_body
      %s20 = ssub.s32 %s15, 1
      %s21 = ssub.s32 %s15, 2
      %s28 = sadd.s32 1, %s23
      %p29 = scmp.ge.s32.totalorder %s28, 1
      %s30 = scalar_select %p29, 0, %s28
      %s31 = sadd.s32 1, %s22
      %s32 = scalar_select %p29, %s31, %s22
      %p33 = scmp.ge.s32.totalorder %s32, 2
      %s34 = scalar_select %p33, 0, %s32
      %s35 = ssub.s32 %s22, %s34
      %p36 = scmp.eq.s32.totalorder %s35, 0
      %s38 = sadd.s32 %s37, 1
      %s39 = scalar_select %p36, %s37, %s38
      %p42 = pneg %p36
      %p43 = scmp.eq.s32.totalorder %s15, 1
      %p44 = por %p42, %p43
      %p45 = scmp.ne.s32.totalorder %s37, %s40
      %p46 = scmp.eq.s32.totalorder %s15, 0
      %p47 = por %p45, %p46
      %p48 = scmp.ne.s32.totalorder %s37, %s40
      %p49 = scmp.eq.s32.totalorder %s20, 1
      %p50 = por %p48, %p49
      %p51 = scmp.ne.s32.totalorder %s40, %s41
      %p52 = scmp.eq.s32.totalorder %s20, 0
      %p53 = por %p51, %p52
      %p54 = scmp.ne.s32.totalorder %s40, %s41
      %p55 = scmp.eq.s32.totalorder %s21, 1
      %p56 = por %p54, %p55
      %p58 = scmp.ne.s32.totalorder %s41, %s57
      %p59 = scmp.eq.s32.totalorder %s21, 0
      %p60 = por %p58, %p59
      %s61 = ssub.s32 %s22, %s34
      %s62 = ssub.s32 %s23, %s30
      %s63 = sor.u32 %s61, %s62
      %p64 = scmp.eq.s32.totalorder %s63, 0
      %s66 = sadd.s32 %s65, 1
      %s67 = scalar_select %p64, %s65, %s66
      %p70 = pneg %p64
      %p71 = scmp.eq.s32.totalorder %s15, 1
      %p72 = por %p70, %p71
      %p73 = scmp.ne.s32.totalorder %s65, %s68
      %p74 = scmp.eq.s32.totalorder %s15, 0
      %p75 = por %p73, %p74
      %p76 = scmp.ne.s32.totalorder %s65, %s68
      %p77 = scmp.eq.s32.totalorder %s20, 1
      %p78 = por %p76, %p77
      %p79 = scmp.ne.s32.totalorder %s68, %s69
      %p80 = scmp.eq.s32.totalorder %s20, 0
      %p81 = por %p79, %p80
      %p82 = scmp.ne.s32.totalorder %s68, %s69
      %p83 = scmp.eq.s32.totalorder %s21, 1
      %p84 = por %p82, %p83
      %p86 = scmp.ne.s32.totalorder %s69, %s85
      %p87 = scmp.eq.s32.totalorder %s21, 0
      %p88 = por %p86, %p87
      %s89 = ssub.s32 %s23, %s30
      %p90 = scmp.eq.s32.totalorder %s89, 0
      %s92 = sadd.s32 %s91, 1
      %s93 = scalar_select %p90, %s91, %s92
      %p96 = pneg %p90
      %p97 = scmp.eq.s32.totalorder %s15, 1
      %p98 = por %p96, %p97
      %p99 = scmp.ne.s32.totalorder %s91, %s94
      %p100 = scmp.eq.s32.totalorder %s15, 0
      %p101 = por %p99, %p100
      %p102 = scmp.ne.s32.totalorder %s91, %s94
      %p103 = scmp.eq.s32.totalorder %s20, 1
      %p104 = por %p102, %p103
      %p105 = scmp.ne.s32.totalorder %s94, %s95
      %p106 = scmp.eq.s32.totalorder %s20, 0
      %p107 = por %p105, %p106
      %p108 = scmp.ne.s32.totalorder %s94, %s95
      %p109 = scmp.eq.s32.totalorder %s21, 1
      %p110 = por %p108, %p109
      %p112 = scmp.ne.s32.totalorder %s95, %s111
      %p113 = scmp.eq.s32.totalorder %s21, 0
      %p114 = por %p112, %p113
      %s116 = sadd.s32 %s115, 1
      %p119 = scmp.eq.s32.totalorder %s15, 1
      %p120 = scmp.ne.s32.totalorder %s115, %s117
      %p121 = scmp.eq.s32.totalorder %s15, 0
      %p122 = por %p120, %p121
      %p123 = scmp.ne.s32.totalorder %s115, %s117
      %p124 = scmp.eq.s32.totalorder %s20, 1
      %p125 = por %p123, %p124
      %p126 = scmp.ne.s32.totalorder %s117, %s118
      %p127 = scmp.eq.s32.totalorder %s20, 0
      %p128 = por %p126, %p127
      %p129 = scmp.ne.s32.totalorder %s117, %s118
      %p130 = scmp.eq.s32.totalorder %s21, 1
      %p131 = por %p129, %p130
      %p133 = scmp.ne.s32.totalorder %s118, %s132
      %p134 = scmp.eq.s32.totalorder %s21, 0
      %p135 = por %p133, %p134
      %s137 = sadd.s32 %s136, 1
      %p140 = scmp.eq.s32.totalorder %s15, 1
      %p141 = scmp.ne.s32.totalorder %s136, %s138
      %p142 = scmp.eq.s32.totalorder %s15, 0
      %p143 = por %p141, %p142
      %p144 = scmp.ne.s32.totalorder %s136, %s138
      %p145 = scmp.eq.s32.totalorder %s20, 1
      %p146 = por %p144, %p145
      %p147 = scmp.ne.s32.totalorder %s138, %s139
      %p148 = scmp.eq.s32.totalorder %s20, 0
      %p149 = por %p147, %p148
      %p150 = scmp.ne.s32.totalorder %s138, %s139
      %p151 = scmp.eq.s32.totalorder %s21, 1
      %p152 = por %p150, %p151
      %p154 = scmp.ne.s32.totalorder %s139, %s153
      %p155 = scmp.eq.s32.totalorder %s21, 0
      %p156 = por %p154, %p155
      %s158 = sadd.s32 %s157, 1
      %p161 = scmp.eq.s32.totalorder %s15, 1
      %p162 = scmp.ne.s32.totalorder %s157, %s159
      %p163 = scmp.eq.s32.totalorder %s15, 0
      %p164 = por %p162, %p163
      %p165 = scmp.ne.s32.totalorder %s157, %s159
      %p166 = scmp.eq.s32.totalorder %s20, 1
      %p167 = por %p165, %p166
      %p168 = scmp.ne.s32.totalorder %s159, %s160
      %p169 = scmp.eq.s32.totalorder %s20, 0
      %p170 = por %p168, %p169
      %p171 = scmp.ne.s32.totalorder %s159, %s160
      %p172 = scmp.eq.s32.totalorder %s21, 1
      %p173 = por %p171, %p172
      %p175 = scmp.ne.s32.totalorder %s160, %s174
      %p176 = scmp.eq.s32.totalorder %s21, 0
      %p177 = por %p175, %p176
      %s178 = ssub.s32 %s22, %s34
      %p179 = scmp.eq.s32.totalorder %s178, 0
      %s181 = sadd.s32 %s180, 1
      %s182 = scalar_select %p179, %s180, %s181
      %p185 = pneg %p179
      %p186 = scmp.eq.s32.totalorder %s15, 1
      %p187 = por %p185, %p186
      %p188 = scmp.ne.s32.totalorder %s180, %s183
      %p189 = scmp.eq.s32.totalorder %s15, 0
      %p190 = por %p188, %p189
      %p191 = scmp.ne.s32.totalorder %s180, %s183
      %p192 = scmp.eq.s32.totalorder %s20, 1
      %p193 = por %p191, %p192
      %p194 = scmp.ne.s32.totalorder %s183, %s184
      %p195 = scmp.eq.s32.totalorder %s20, 0
      %p196 = por %p194, %p195
      %p197 = scmp.ne.s32.totalorder %s183, %s184
      %p198 = scmp.eq.s32.totalorder %s21, 1
      %p199 = por %p197, %p198
      %p201 = scmp.ne.s32.totalorder %s184, %s200
      %p202 = scmp.eq.s32.totalorder %s21, 0
      %p203 = por %p201, %p202
      %p204 = scmp.le.s32.totalorder 1, %s15
      %p205 = scmp.lt.s32.totalorder %s15, 3
      %p206 = pnand %p204, %p205
      %p207 = pneg %p206
      // Predicated region
      $region9: #{image_encoder_forward.1} parent=5 // pred_check
        _
      $region10: #{image_encoder_forward.1} parent=5 // pred_check_branch
        %209 = sbr.rel (%p206) target = $region12
      $region11: #{image_encoder_forward.1} parent=5 // pred_region
        %s210 = ssub.s32 %s15, 1
        // Predicated region
        $region13: #{image_encoder_forward.1} parent=11 // pred_check
          %p211 = pneg %p107
        $region14: #{image_encoder_forward.1} parent=11 // pred_check_branch
          %213 = sbr.rel (%p211) target = $region16
        $region15: #{image_encoder_forward.1} parent=11 // pred_region
          %s214 = smul.u32 128, %s25
          %p215 = scmp.lt.s32.totalorder %s214, 127
          %s216 = scalar_select %p215, %s214, 127
          %s217 = smul.addr %s216, 4
          %s218 = scalar_lea.vmem %s2, %s217
          %s219 = smul.u32 128, %s25
        $region16: #{image_encoder_forward.1} parent=11 // pred_fallthru
          _
        // Predicated region
        $region17: #{image_encoder_forward.1} parent=11 // pred_check
          %p220 = pneg %p128
        $region18: #{image_encoder_forward.1} parent=11 // pred_check_branch
          %222 = sbr.rel (%p220) target = $region20
        $region19: #{image_encoder_forward.1} parent=11 // pred_region
          _
        $region20: #{image_encoder_forward.1} parent=11 // pred_fallthru
          _
        // Predicated region
        $region21: #{image_encoder_forward.1} parent=11 // pred_check
          %p223 = pneg %p149
        $region22: #{image_encoder_forward.1} parent=11 // pred_check_branch
          %225 = sbr.rel (%p223) target = $region24
        $region23: #{image_encoder_forward.1} parent=11 // pred_region
          _
        $region24: #{image_encoder_forward.1} parent=11 // pred_fallthru
          _
        // Predicated region
        $region25: #{image_encoder_forward.1} parent=11 // pred_check
          %p226 = pneg %p170
        $region26: #{image_encoder_forward.1} parent=11 // pred_check_branch
          %228 = sbr.rel (%p226) target = $region28
        $region27: #{image_encoder_forward.1} parent=11 // pred_region
          _
        $region28: #{image_encoder_forward.1} parent=11 // pred_fallthru
          _
      $region12: #{image_encoder_forward.1} parent=5 // pred_fallthru
        _
      %p229 = scmp.lt.s32.totalorder %s15, 2
      // Predicated region
      $region29: #{image_encoder_forward.1} parent=5 // pred_check
        %p230 = pneg %p229
      $region30: #{image_encoder_forward.1} parent=5 // pred_check_branch
        %232 = sbr.rel (%p230) target = $region32
      $region31: #{image_encoder_forward.1} parent=5 // pred_region
        // Predicated region
        $region33: #{image_encoder_forward.1} parent=31 // pred_check
          %p233 = pneg %p47
        $region34: #{image_encoder_forward.1} parent=31 // pred_check_branch
          %235 = sbr.rel (%p233) target = $region36
        $region35: #{image_encoder_forward.1} parent=31 // pred_region
          %p236 = scmp.lt.s32.totalorder %s22, 1
          %s237 = scalar_select %p236, %s22, 1
          %s238 = smul.addr %s237, 8
          %s239 = scalar_lea.vmem %s0, %s238
        $region36: #{image_encoder_forward.1} parent=31 // pred_fallthru
          _
        // Predicated region
        $region37: #{image_encoder_forward.1} parent=31 // pred_check
          %p240 = pneg %p75
        $region38: #{image_encoder_forward.1} parent=31 // pred_check_branch
          %242 = sbr.rel (%p240) target = $region40
        $region39: #{image_encoder_forward.1} parent=31 // pred_region
          %s243 = smul.u32 8, %s23
          %p244 = scmp.lt.s32.totalorder %s22, 1
          %s245 = scalar_select %p244, %s22, 1
          %p246 = scmp.lt.s32.totalorder %s243, 7
          %s247 = scalar_select %p246, %s243, 7
          %s248 = smul.addr %s245, 8
          %s249 = sadd.s32 %s247, %s248
          %s250 = smul.addr %s249, 8
          %s251 = scalar_lea.vmem %s1, %s250
          %s252 = smul.u32 8, %s23
        $region40: #{image_encoder_forward.1} parent=31 // pred_fallthru
          _
      $region32: #{image_encoder_forward.1} parent=5 // pred_fallthru
        _
      %p253 = scmp.le.s32.totalorder 1, %s15
      %p254 = scmp.lt.s32.totalorder %s15, 3
      %p255 = pnand %p253, %p254
      %p256 = pneg %p255
      // Predicated region
      $region41: #{image_encoder_forward.1} parent=5 // pred_check
        _
      $region42: #{image_encoder_forward.1} parent=5 // pred_check_branch
        %258 = sbr.rel (%p255) target = $region44
      $region43: #{image_encoder_forward.1} parent=5 // pred_region
        %s259 = ssub.s32 %s15, 1
        %p260 = scmp.lt.s32.totalorder %s24, 1
        %s261 = scalar_select %p260, %s24, 1
        %s262 = smul.addr %s261, 8
        %s263 = scalar_lea.vmem %s0, %s262
        %p264 = pneg %p53
        %p265 = pneg %p50
        %s266 = smul.u32 8, %s25
        %p267 = scmp.lt.s32.totalorder %s24, 1
        %s268 = scalar_select %p267, %s24, 1
        %p269 = scmp.lt.s32.totalorder %s266, 7
        %s270 = scalar_select %p269, %s266, 7
        %s271 = smul.addr %s268, 8
        %s272 = sadd.s32 %s270, %s271
        %s273 = smul.addr %s272, 8
        %s274 = scalar_lea.vmem %s1, %s273
        %p275 = pneg %p81
        %p276 = pneg %p78
        %s277 = smul.u32 128, %s25
        %p278 = scmp.lt.s32.totalorder %s277, 127
        %s279 = scalar_select %p278, %s277, 127
        %s280 = smul.addr %s279, 4
        %s281 = scalar_lea.vmem %s2, %s280
        %p282 = pneg %p107
        %p283 = pneg %p104
        %p284 = pneg %p128
        %p285 = pneg %p125
        %p286 = pneg %p149
        %p287 = pneg %p146
        %p288 = pneg %p170
        %p289 = pneg %p167
        %p290 = pneg %p196
        %p291 = pneg %p193
        %s292 = sand.u32 %s183, 1
        %s293 = scalar_lea.sflag [#allocation4], %s292
        %s294 = sand.u32 %s183, 1
        %s295 = smul.addr %s294, 8
        %s296 = scalar_lea.vmem [#allocation3], %s295
        %p297 = scmp.lt.s32.totalorder %s24, 1
        %s298 = scalar_select %p297, %s24, 1
        %s299 = smul.addr %s298, 8
        %s300 = scalar_lea.vmem %s0, %s299
        %s301 = smul.u32 8, %s25
        %p302 = scmp.lt.s32.totalorder %s24, 1
        %s303 = scalar_select %p302, %s24, 1
        %p304 = scmp.lt.s32.totalorder %s301, 7
        %s305 = scalar_select %p304, %s301, 7
        %s306 = smul.addr %s303, 8
        %s307 = sadd.s32 %s305, %s306
        %s308 = smul.addr %s307, 8
        %s309 = scalar_lea.vmem %s1, %s308
        %s310 = smul.u32 8, %s25
        %s311 = smul.u32 128, %s25
        %p312 = scmp.lt.s32.totalorder %s311, 127
        %s313 = scalar_select %p312, %s311, 127
        %s314 = smul.addr %s313, 4
        %s315 = scalar_lea.vmem %s2, %s314
        %s316 = smul.u32 128, %s25
        %p318 = scmp.eq.s32.totalorder %s25, 0
        // Predicated region
        $region45: #{image_encoder_forward.1} parent=43 // pred_check
          %p319 = pneg %p318
        $region46: #{image_encoder_forward.1} parent=43 // pred_check_branch
          %321 = sbr.rel (%p319) target = $region48
        $region47: #{image_encoder_forward.1} parent=43 // pred_region
          %v322 = vld [vmem:[%s3] sm:$0x1]
          %v324 = vlaneseq
          %v325 = vshrl.u32 %v324, 7
          %v326 = vsub.s32 0, %v325
          %v327 = vrot.slane %v322, %v326
          %329 = vst [vmem:[#allocation2] sm:$0xff] %v327
          %v330 = vld [vmem:[%s300] sm:$0xff]
          %v331 = vpack.c.bf16 %v330, %v330
          %v332 = vld [vmem:[%s4] sm:$0xf]
          %v333 = vld [vmem:[%s4 + $0x4] sm:$0xf]
          %v334 = vld [vmem:[%s4 + $0x8] sm:$0xf]
          %v335 = vld [vmem:[%s4 + $0xc] sm:$0xf]
          %v336 = vld [vmem:[%s4 + $0x10] sm:$0xf]
          %v337 = vld [vmem:[%s4 + $0x14] sm:$0xf]
          %v338 = vld [vmem:[%s4 + $0x18] sm:$0xf]
          %v339 = vld [vmem:[%s4 + $0x1c] sm:$0xf]
          %v340 = vld [vmem:[%s4 + $0x20] sm:$0xf]
          %v341 = vld [vmem:[%s4 + $0x24] sm:$0xf]
          %v342 = vld [vmem:[%s4 + $0x28] sm:$0xf]
          %v343 = vld [vmem:[%s4 + $0x2c] sm:$0xf]
          %v344 = vld [vmem:[%s4 + $0x30] sm:$0xf]
          %v345 = vld [vmem:[%s4 + $0x34] sm:$0xf]
          %v346 = vld [vmem:[%s4 + $0x38] sm:$0xf]
          %v347 = vld [vmem:[%s4 + $0x3c] sm:$0xf]
          %v348 = vld [vmem:[%s5] sm:$0x1]
          %v349 = vlaneseq
          %v350 = vshrl.u32 %v349, 7
          %v351 = vsub.s32 0, %v350
          %v352 = vrot.slane %v348, %v351
          %v369 = vunpack.c.l.b16 %v332
          %v370 = vunpack.c.l.b16 %v333
          %v371 = vunpack.c.l.b16 %v334
          %v372 = vunpack.c.l.b16 %v335
          %v373 = vunpack.c.l.b16 %v336
          %v374 = vunpack.c.l.b16 %v337
          %v375 = vunpack.c.l.b16 %v338
          %v376 = vunpack.c.l.b16 %v339
          %v377 = vunpack.c.l.b16 %v340
          %v378 = vunpack.c.l.b16 %v341
          %v379 = vunpack.c.l.b16 %v342
          %v380 = vunpack.c.l.b16 %v343
          %v381 = vunpack.c.l.b16 %v344
          %v382 = vunpack.c.l.b16 %v345
          %v383 = vunpack.c.l.b16 %v346
          %v384 = vunpack.c.l.b16 %v347
          %v385 = vpack.c.b16 %v370, %v369
          %v386 = vpack.c.b16 %v372, %v371
          %v387 = vpack.c.b16 %v374, %v373
          %v388 = vpack.c.b16 %v376, %v375
          %v389 = vpack.c.b16 %v378, %v377
          %v390 = vpack.c.b16 %v380, %v379
          %v391 = vpack.c.b16 %v382, %v381
          %v392 = vpack.c.b16 %v384, %v383
          %401 = vmatprep.subr.bf16.mxu0 0
          %402 = vmatpush1.bf16.msra.mxu0 %v385
          %403 = vmatprep.subr.bf16.mxu0 0
          %404 = vmatpush1.bf16.msra.mxu0 %v386
          %405 = vmatprep.subr.bf16.mxu0 0
          %406 = vmatpush1.bf16.msra.mxu0 %v387
          %407 = vmatprep.subr.bf16.mxu0 0
          %408 = vmatpush1.bf16.msra.mxu0 %v388
          %409 = vmatprep.subr.bf16.mxu0 0
          %410 = vmatpush1.bf16.msra.mxu0 %v389
          %411 = vmatprep.subr.bf16.mxu0 0
          %412 = vmatpush1.bf16.msra.mxu0 %v390
          %413 = vmatprep.subr.bf16.mxu0 0
          %414 = vmatpush1.bf16.msra.mxu0 %v391
          %415 = vmatprep.subr.bf16.mxu0 0
          %416 = vmatpush1.bf16.msra.mxu0 %v392
          %417 = vmatprep.subr.bf16.mxu0 0
          %418 = vmatpush1.bf16.msra.mxu0 0
          %419 = vmatprep.subr.bf16.mxu0 0
          %420 = vmatpush1.bf16.msra.mxu0 0
          %421 = vmatprep.subr.bf16.mxu0 0
          %422 = vmatpush1.bf16.msra.mxu0 0
          %423 = vmatprep.subr.bf16.mxu0 0
          %424 = vmatpush1.bf16.msra.mxu0 0
          %425 = vmatprep.subr.bf16.mxu0 0
          %426 = vmatpush1.bf16.msra.mxu0 0
          %427 = vmatprep.subr.bf16.mxu0 0
          %428 = vmatpush1.bf16.msra.mxu0 0
          %429 = vmatprep.subr.bf16.mxu0 0
          %430 = vmatpush1.bf16.msra.mxu0 0
          %431 = vmatprep.subr.bf16.mxu0 0
          %432 = vmatpush1.bf16.msra.mxu0 0
          %433 = vmatprep.mubr.bf16.mxu0 0
          %434 = vmatmul.mubr.bf16.gmra.mrb[0].mxu0 %v331
          %v435 = vpop.f32.mrb[0].mxu0
          %v436 = vadd.f32 %v352, %v435
          %v437 = vpop.f32.mrb[0].mxu0
          %v438 = vpop.f32.mrb[0].mxu0
          %v439 = vpop.f32.mrb[0].mxu0
          %440 = vdwg.mxu0
          %441 = vst [vmem:[%s296] sm:$0xff] %v436
        $region48: #{image_encoder_forward.1} parent=43 // pred_fallthru
          _
        %v442 = vld [vmem:[#allocation2] sm:$0xff]
        %v443 = vld [vmem:[%s309] sm:$0xff]
        %v444 = vld [vmem:[%s309 + $0x8] sm:$0xff]
        %v445 = vld [vmem:[%s309 + $0x10] sm:$0xff]
        %v446 = vld [vmem:[%s309 + $0x18] sm:$0xff]
        %v447 = vld [vmem:[%s309 + $0x20] sm:$0xff]
        %v448 = vld [vmem:[%s309 + $0x28] sm:$0xff]
        %v449 = vld [vmem:[%s309 + $0x30] sm:$0xff]
        %v450 = vld [vmem:[%s309 + $0x38] sm:$0xff]
        %v451 = vpack.c.bf16 %v443, %v443
        %v452 = vpack.c.bf16 %v444, %v444
        %v453 = vpack.c.bf16 %v445, %v445
        %v454 = vpack.c.bf16 %v446, %v446
        %v455 = vpack.c.bf16 %v447, %v447
        %v456 = vpack.c.bf16 %v448, %v448
        %v457 = vpack.c.bf16 %v449, %v449
        %v458 = vpack.c.bf16 %v450, %v450
        %v459 = vld [vmem:[%s315] sm:$0xf]
        %v460 = vld [vmem:[%s315 + $0x4] sm:$0xf]
        %v461 = vld [vmem:[%s315 + $0x8] sm:$0xf]
        %v462 = vld [vmem:[%s315 + $0xc] sm:$0xf]
        %v463 = vld [vmem:[%s315 + $0x10] sm:$0xf]
        %v464 = vld [vmem:[%s315 + $0x14] sm:$0xf]
        %v465 = vld [vmem:[%s315 + $0x18] sm:$0xf]
        %v466 = vld [vmem:[%s315 + $0x1c] sm:$0xf]
        %v467 = vld [vmem:[%s315 + $0x20] sm:$0xf]
        %v468 = vld [vmem:[%s315 + $0x24] sm:$0xf]
        %v469 = vld [vmem:[%s315 + $0x28] sm:$0xf]
        %v470 = vld [vmem:[%s315 + $0x2c] sm:$0xf]
        %v471 = vld [vmem:[%s315 + $0x30] sm:$0xf]
        %v472 = vld [vmem:[%s315 + $0x34] sm:$0xf]
        %v473 = vld [vmem:[%s315 + $0x38] sm:$0xf]
        %v474 = vld [vmem:[%s315 + $0x3c] sm:$0xf]
        %v475 = vld [vmem:[%s315 + $0x40] sm:$0xf]
        %v476 = vld [vmem:[%s315 + $0x44] sm:$0xf]
        %v477 = vld [vmem:[%s315 + $0x48] sm:$0xf]
        %v478 = vld [vmem:[%s315 + $0x4c] sm:$0xf]
        %v479 = vld [vmem:[%s315 + $0x50] sm:$0xf]
        %v480 = vld [vmem:[%s315 + $0x54] sm:$0xf]
        %v481 = vld [vmem:[%s315 + $0x58] sm:$0xf]
        %v482 = vld [vmem:[%s315 + $0x5c] sm:$0xf]
        %v483 = vld [vmem:[%s315 + $0x60] sm:$0xf]
        %v484 = vld [vmem:[%s315 + $0x64] sm:$0xf]
        %v485 = vld [vmem:[%s315 + $0x68] sm:$0xf]
        %v486 = vld [vmem:[%s315 + $0x6c] sm:$0xf]
        %v487 = vld [vmem:[%s315 + $0x70] sm:$0xf]
        %v488 = vld [vmem:[%s315 + $0x74] sm:$0xf]
        %v489 = vld [vmem:[%s315 + $0x78] sm:$0xf]
        %v490 = vld [vmem:[%s315 + $0x7c] sm:$0xf]
        %v491 = vld [vmem:[%s315 + $0x80] sm:$0xf]
        %v492 = vld [vmem:[%s315 + $0x84] sm:$0xf]
        %v493 = vld [vmem:[%s315 + $0x88] sm:$0xf]
        %v494 = vld [vmem:[%s315 + $0x8c] sm:$0xf]
        %v495 = vld [vmem:[%s315 + $0x90] sm:$0xf]
        %v496 = vld [vmem:[%s315 + $0x94] sm:$0xf]
        %v497 = vld [vmem:[%s315 + $0x98] sm:$0xf]
        %v498 = vld [vmem:[%s315 + $0x9c] sm:$0xf]
        %v499 = vld [vmem:[%s315 + $0xa0] sm:$0xf]
        %v500 = vld [vmem:[%s315 + $0xa4] sm:$0xf]
        %v501 = vld [vmem:[%s315 + $0xa8] sm:$0xf]
        %v502 = vld [vmem:[%s315 + $0xac] sm:$0xf]
        %v503 = vld [vmem:[%s315 + $0xb0] sm:$0xf]
        %v504 = vld [vmem:[%s315 + $0xb4] sm:$0xf]
        %v505 = vld [vmem:[%s315 + $0xb8] sm:$0xf]
        %v506 = vld [vmem:[%s315 + $0xbc] sm:$0xf]
        %v507 = vld [vmem:[%s315 + $0xc0] sm:$0xf]
        %v508 = vld [vmem:[%s315 + $0xc4] sm:$0xf]
        %v509 = vld [vmem:[%s315 + $0xc8] sm:$0xf]
        %v510 = vld [vmem:[%s315 + $0xcc] sm:$0xf]
        %v511 = vld [vmem:[%s315 + $0xd0] sm:$0xf]
        %v512 = vld [vmem:[%s315 + $0xd4] sm:$0xf]
        %v513 = vld [vmem:[%s315 + $0xd8] sm:$0xf]
        %v514 = vld [vmem:[%s315 + $0xdc] sm:$0xf]
        %v515 = vld [vmem:[%s315 + $0xe0] sm:$0xf]
        %v516 = vld [vmem:[%s315 + $0xe4] sm:$0xf]
        %v517 = vld [vmem:[%s315 + $0xe8] sm:$0xf]
        %v518 = vld [vmem:[%s315 + $0xec] sm:$0xf]
        %v519 = vld [vmem:[%s315 + $0xf0] sm:$0xf]
        %v520 = vld [vmem:[%s315 + $0xf4] sm:$0xf]
        %v521 = vld [vmem:[%s315 + $0xf8] sm:$0xf]
        %v522 = vld [vmem:[%s315 + $0xfc] sm:$0xf]
        %v523 = vld [vmem:[%s315 + $0x100] sm:$0xf]
        %v524 = vld [vmem:[%s315 + $0x104] sm:$0xf]
        %v525 = vld [vmem:[%s315 + $0x108] sm:$0xf]
        %v526 = vld [vmem:[%s315 + $0x10c] sm:$0xf]
        %v527 = vld [vmem:[%s315 + $0x110] sm:$0xf]
        %v528 = vld [vmem:[%s315 + $0x114] sm:$0xf]
        %v529 = vld [vmem:[%s315 + $0x118] sm:$0xf]
        %v530 = vld [vmem:[%s315 + $0x11c] sm:$0xf]
        %v531 = vld [vmem:[%s315 + $0x120] sm:$0xf]
        %v532 = vld [vmem:[%s315 + $0x124] sm:$0xf]
        %v533 = vld [vmem:[%s315 + $0x128] sm:$0xf]
        %v534 = vld [vmem:[%s315 + $0x12c] sm:$0xf]
        %v535 = vld [vmem:[%s315 + $0x130] sm:$0xf]
        %v536 = vld [vmem:[%s315 + $0x134] sm:$0xf]
        %v537 = vld [vmem:[%s315 + $0x138] sm:$0xf]
        %v538 = vld [vmem:[%s315 + $0x13c] sm:$0xf]
        %v539 = vld [vmem:[%s315 + $0x140] sm:$0xf]
        %v540 = vld [vmem:[%s315 + $0x144] sm:$0xf]
        %v541 = vld [vmem:[%s315 + $0x148] sm:$0xf]
        %v542 = vld [vmem:[%s315 + $0x14c] sm:$0xf]
        %v543 = vld [vmem:[%s315 + $0x150] sm:$0xf]
        %v544 = vld [vmem:[%s315 + $0x154] sm:$0xf]
        %v545 = vld [vmem:[%s315 + $0x158] sm:$0xf]
        %v546 = vld [vmem:[%s315 + $0x15c] sm:$0xf]
        %v547 = vld [vmem:[%s315 + $0x160] sm:$0xf]
        %v548 = vld [vmem:[%s315 + $0x164] sm:$0xf]
        %v549 = vld [vmem:[%s315 + $0x168] sm:$0xf]
        %v550 = vld [vmem:[%s315 + $0x16c] sm:$0xf]
        %v551 = vld [vmem:[%s315 + $0x170] sm:$0xf]
        %v552 = vld [vmem:[%s315 + $0x174] sm:$0xf]
        %v553 = vld [vmem:[%s315 + $0x178] sm:$0xf]
        %v554 = vld [vmem:[%s315 + $0x17c] sm:$0xf]
        %v555 = vld [vmem:[%s315 + $0x180] sm:$0xf]
        %v556 = vld [vmem:[%s315 + $0x184] sm:$0xf]
        %v557 = vld [vmem:[%s315 + $0x188] sm:$0xf]
        %v558 = vld [vmem:[%s315 + $0x18c] sm:$0xf]
        %v559 = vld [vmem:[%s315 + $0x190] sm:$0xf]
        %v560 = vld [vmem:[%s315 + $0x194] sm:$0xf]
        %v561 = vld [vmem:[%s315 + $0x198] sm:$0xf]
        %v562 = vld [vmem:[%s315 + $0x19c] sm:$0xf]
        %v563 = vld [vmem:[%s315 + $0x1a0] sm:$0xf]
        %v564 = vld [vmem:[%s315 + $0x1a4] sm:$0xf]
        %v565 = vld [vmem:[%s315 + $0x1a8] sm:$0xf]
        %v566 = vld [vmem:[%s315 + $0x1ac] sm:$0xf]
        %v567 = vld [vmem:[%s315 + $0x1b0] sm:$0xf]
        %v568 = vld [vmem:[%s315 + $0x1b4] sm:$0xf]
        %v569 = vld [vmem:[%s315 + $0x1b8] sm:$0xf]
        %v570 = vld [vmem:[%s315 + $0x1bc] sm:$0xf]
        %v571 = vld [vmem:[%s315 + $0x1c0] sm:$0xf]
        %v572 = vld [vmem:[%s315 + $0x1c4] sm:$0xf]
        %v573 = vld [vmem:[%s315 + $0x1c8] sm:$0xf]
        %v574 = vld [vmem:[%s315 + $0x1cc] sm:$0xf]
        %v575 = vld [vmem:[%s315 + $0x1d0] sm:$0xf]
        %v576 = vld [vmem:[%s315 + $0x1d4] sm:$0xf]
        %v577 = vld [vmem:[%s315 + $0x1d8] sm:$0xf]
        %v578 = vld [vmem:[%s315 + $0x1dc] sm:$0xf]
        %v579 = vld [vmem:[%s315 + $0x1e0] sm:$0xf]
        %v580 = vld [vmem:[%s315 + $0x1e4] sm:$0xf]
        %v581 = vld [vmem:[%s315 + $0x1e8] sm:$0xf]
        %v582 = vld [vmem:[%s315 + $0x1ec] sm:$0xf]
        %v583 = vld [vmem:[%s315 + $0x1f0] sm:$0xf]
        %v584 = vld [vmem:[%s315 + $0x1f4] sm:$0xf]
        %v585 = vld [vmem:[%s315 + $0x1f8] sm:$0xf]
        %v586 = vld [vmem:[%s315 + $0x1fc] sm:$0xf]
        %v715 = vunpack.c.l.b16 %v459
        %v716 = vunpack.c.l.b16 %v460
        %v717 = vunpack.c.l.b16 %v461
        %v718 = vunpack.c.l.b16 %v462
        %v719 = vunpack.c.l.b16 %v463
        %v720 = vunpack.c.l.b16 %v464
        %v721 = vunpack.c.l.b16 %v465
        %v722 = vunpack.c.l.b16 %v466
        %v723 = vunpack.c.l.b16 %v467
        %v724 = vunpack.c.l.b16 %v468
        %v725 = vunpack.c.l.b16 %v469
        %v726 = vunpack.c.l.b16 %v470
        %v727 = vunpack.c.l.b16 %v471
        %v728 = vunpack.c.l.b16 %v472
        %v729 = vunpack.c.l.b16 %v473
        %v730 = vunpack.c.l.b16 %v474
        %v731 = vunpack.c.l.b16 %v475
        %v732 = vunpack.c.l.b16 %v476
        %v733 = vunpack.c.l.b16 %v477
        %v734 = vunpack.c.l.b16 %v478
        %v735 = vunpack.c.l.b16 %v479
        %v736 = vunpack.c.l.b16 %v480
        %v737 = vunpack.c.l.b16 %v481
        %v738 = vunpack.c.l.b16 %v482
        %v739 = vunpack.c.l.b16 %v483
        %v740 = vunpack.c.l.b16 %v484
        %v741 = vunpack.c.l.b16 %v485
        %v742 = vunpack.c.l.b16 %v486
        %v743 = vunpack.c.l.b16 %v487
        %v744 = vunpack.c.l.b16 %v488
        %v745 = vunpack.c.l.b16 %v489
        %v746 = vunpack.c.l.b16 %v490
        %v747 = vunpack.c.l.b16 %v491
        %v748 = vunpack.c.l.b16 %v492
        %v749 = vunpack.c.l.b16 %v493
        %v750 = vunpack.c.l.b16 %v494
        %v751 = vunpack.c.l.b16 %v495
        %v752 = vunpack.c.l.b16 %v496
        %v753 = vunpack.c.l.b16 %v497
        %v754 = vunpack.c.l.b16 %v498
        %v755 = vunpack.c.l.b16 %v499
        %v756 = vunpack.c.l.b16 %v500
        %v757 = vunpack.c.l.b16 %v501
        %v758 = vunpack.c.l.b16 %v502
        %v759 = vunpack.c.l.b16 %v503
        %v760 = vunpack.c.l.b16 %v504
        %v761 = vunpack.c.l.b16 %v505
        %v762 = vunpack.c.l.b16 %v506
        %v763 = vunpack.c.l.b16 %v507
        %v764 = vunpack.c.l.b16 %v508
        %v765 = vunpack.c.l.b16 %v509
        %v766 = vunpack.c.l.b16 %v510
        %v767 = vunpack.c.l.b16 %v511
        %v768 = vunpack.c.l.b16 %v512
        %v769 = vunpack.c.l.b16 %v513
        %v770 = vunpack.c.l.b16 %v514
        %v771 = vunpack.c.l.b16 %v515
        %v772 = vunpack.c.l.b16 %v516
        %v773 = vunpack.c.l.b16 %v517
        %v774 = vunpack.c.l.b16 %v518
        %v775 = vunpack.c.l.b16 %v519
        %v776 = vunpack.c.l.b16 %v520
        %v777 = vunpack.c.l.b16 %v521
        %v778 = vunpack.c.l.b16 %v522
        %v779 = vunpack.c.l.b16 %v523
        %v780 = vunpack.c.l.b16 %v524
        %v781 = vunpack.c.l.b16 %v525
        %v782 = vunpack.c.l.b16 %v526
        %v783 = vunpack.c.l.b16 %v527
        %v784 = vunpack.c.l.b16 %v528
        %v785 = vunpack.c.l.b16 %v529
        %v786 = vunpack.c.l.b16 %v530
        %v787 = vunpack.c.l.b16 %v531
        %v788 = vunpack.c.l.b16 %v532
        %v789 = vunpack.c.l.b16 %v533
        %v790 = vunpack.c.l.b16 %v534
        %v791 = vunpack.c.l.b16 %v535
        %v792 = vunpack.c.l.b16 %v536
        %v793 = vunpack.c.l.b16 %v537
        %v794 = vunpack.c.l.b16 %v538
        %v795 = vunpack.c.l.b16 %v539
        %v796 = vunpack.c.l.b16 %v540
        %v797 = vunpack.c.l.b16 %v541
        %v798 = vunpack.c.l.b16 %v542
        %v799 = vunpack.c.l.b16 %v543
        %v800 = vunpack.c.l.b16 %v544
        %v801 = vunpack.c.l.b16 %v545
        %v802 = vunpack.c.l.b16 %v546
        %v803 = vunpack.c.l.b16 %v547
        %v804 = vunpack.c.l.b16 %v548
        %v805 = vunpack.c.l.b16 %v549
        %v806 = vunpack.c.l.b16 %v550
        %v807 = vunpack.c.l.b16 %v551
        %v808 = vunpack.c.l.b16 %v552
        %v809 = vunpack.c.l.b16 %v553
        %v810 = vunpack.c.l.b16 %v554
        %v811 = vunpack.c.l.b16 %v555
        %v812 = vunpack.c.l.b16 %v556
        %v813 = vunpack.c.l.b16 %v557
        %v814 = vunpack.c.l.b16 %v558
        %v815 = vunpack.c.l.b16 %v559
        %v816 = vunpack.c.l.b16 %v560
        %v817 = vunpack.c.l.b16 %v561
        %v818 = vunpack.c.l.b16 %v562
        %v819 = vunpack.c.l.b16 %v563
        %v820 = vunpack.c.l.b16 %v564
        %v821 = vunpack.c.l.b16 %v565
        %v822 = vunpack.c.l.b16 %v566
        %v823 = vunpack.c.l.b16 %v567
        %v824 = vunpack.c.l.b16 %v568
        %v825 = vunpack.c.l.b16 %v569
        %v826 = vunpack.c.l.b16 %v570
        %v827 = vunpack.c.l.b16 %v571
        %v828 = vunpack.c.l.b16 %v572
        %v829 = vunpack.c.l.b16 %v573
        %v830 = vunpack.c.l.b16 %v574
        %v831 = vunpack.c.l.b16 %v575
        %v832 = vunpack.c.l.b16 %v576
        %v833 = vunpack.c.l.b16 %v577
        %v834 = vunpack.c.l.b16 %v578
        %v835 = vunpack.c.l.b16 %v579
        %v836 = vunpack.c.l.b16 %v580
        %v837 = vunpack.c.l.b16 %v581
        %v838 = vunpack.c.l.b16 %v582
        %v839 = vunpack.c.l.b16 %v583
        %v840 = vunpack.c.l.b16 %v584
        %v841 = vunpack.c.l.b16 %v585
        %v842 = vunpack.c.l.b16 %v586
        %v843 = vpack.c.b16 %v716, %v715
        %v844 = vpack.c.b16 %v718, %v717
        %v845 = vpack.c.b16 %v720, %v719
        %v846 = vpack.c.b16 %v722, %v721
        %v847 = vpack.c.b16 %v724, %v723
        %v848 = vpack.c.b16 %v726, %v725
        %v849 = vpack.c.b16 %v728, %v727
        %v850 = vpack.c.b16 %v730, %v729
        %v851 = vpack.c.b16 %v732, %v731
        %v852 = vpack.c.b16 %v734, %v733
        %v853 = vpack.c.b16 %v736, %v735
        %v854 = vpack.c.b16 %v738, %v737
        %v855 = vpack.c.b16 %v740, %v739
        %v856 = vpack.c.b16 %v742, %v741
        %v857 = vpack.c.b16 %v744, %v743
        %v858 = vpack.c.b16 %v746, %v745
        %v859 = vpack.c.b16 %v748, %v747
        %v860 = vpack.c.b16 %v750, %v749
        %v861 = vpack.c.b16 %v752, %v751
        %v862 = vpack.c.b16 %v754, %v753
        %v863 = vpack.c.b16 %v756, %v755
        %v864 = vpack.c.b16 %v758, %v757
        %v865 = vpack.c.b16 %v760, %v759
        %v866 = vpack.c.b16 %v762, %v761
        %v867 = vpack.c.b16 %v764, %v763
        %v868 = vpack.c.b16 %v766, %v765
        %v869 = vpack.c.b16 %v768, %v767
        %v870 = vpack.c.b16 %v770, %v769
        %v871 = vpack.c.b16 %v772, %v771
        %v872 = vpack.c.b16 %v774, %v773
        %v873 = vpack.c.b16 %v776, %v775
        %v874 = vpack.c.b16 %v778, %v777
        %v875 = vpack.c.b16 %v780, %v779
        %v876 = vpack.c.b16 %v782, %v781
        %v877 = vpack.c.b16 %v784, %v783
        %v878 = vpack.c.b16 %v786, %v785
        %v879 = vpack.c.b16 %v788, %v787
        %v880 = vpack.c.b16 %v790, %v789
        %v881 = vpack.c.b16 %v792, %v791
        %v882 = vpack.c.b16 %v794, %v793
        %v883 = vpack.c.b16 %v796, %v795
        %v884 = vpack.c.b16 %v798, %v797
        %v885 = vpack.c.b16 %v800, %v799
        %v886 = vpack.c.b16 %v802, %v801
        %v887 = vpack.c.b16 %v804, %v803
        %v888 = vpack.c.b16 %v806, %v805
        %v889 = vpack.c.b16 %v808, %v807
        %v890 = vpack.c.b16 %v810, %v809
        %v891 = vpack.c.b16 %v812, %v811
        %v892 = vpack.c.b16 %v814, %v813
        %v893 = vpack.c.b16 %v816, %v815
        %v894 = vpack.c.b16 %v818, %v817
        %v895 = vpack.c.b16 %v820, %v819
        %v896 = vpack.c.b16 %v822, %v821
        %v897 = vpack.c.b16 %v824, %v823
        %v898 = vpack.c.b16 %v826, %v825
        %v899 = vpack.c.b16 %v828, %v827
        %v900 = vpack.c.b16 %v830, %v829
        %v901 = vpack.c.b16 %v832, %v831
        %v902 = vpack.c.b16 %v834, %v833
        %v903 = vpack.c.b16 %v836, %v835
        %v904 = vpack.c.b16 %v838, %v837
        %v905 = vpack.c.b16 %v840, %v839
        %v906 = vpack.c.b16 %v842, %v841
        %971 = vmatprep.subr.bf16.mxu0 0
        %972 = vmatpush1.bf16.msra.mxu0 %v843
        %973 = vmatprep.subr.bf16.mxu0 0
        %974 = vmatpush1.bf16.msra.mxu0 %v844
        %975 = vmatprep.subr.bf16.mxu0 0
        %976 = vmatpush1.bf16.msra.mxu0 %v845
        %977 = vmatprep.subr.bf16.mxu0 0
        %978 = vmatpush1.bf16.msra.mxu0 %v846
        %979 = vmatprep.subr.bf16.mxu0 0
        %980 = vmatpush1.bf16.msra.mxu0 %v847
        %981 = vmatprep.subr.bf16.mxu0 0
        %982 = vmatpush1.bf16.msra.mxu0 %v848
        %983 = vmatprep.subr.bf16.mxu0 0
        %984 = vmatpush1.bf16.msra.mxu0 %v849
        %985 = vmatprep.subr.bf16.mxu0 0
        %986 = vmatpush1.bf16.msra.mxu0 %v850
        %987 = vmatprep.subr.bf16.mxu0 0
        %988 = vmatpush1.bf16.msra.mxu0 %v851
        %989 = vmatprep.subr.bf16.mxu0 0
        %990 = vmatpush1.bf16.msra.mxu0 %v852
        %991 = vmatprep.subr.bf16.mxu0 0
        %992 = vmatpush1.bf16.msra.mxu0 %v853
        %993 = vmatprep.subr.bf16.mxu0 0
        %994 = vmatpush1.bf16.msra.mxu0 %v854
        %995 = vmatprep.subr.bf16.mxu0 0
        %996 = vmatpush1.bf16.msra.mxu0 %v855
        %997 = vmatprep.subr.bf16.mxu0 0
        %998 = vmatpush1.bf16.msra.mxu0 %v856
        %999 = vmatprep.subr.bf16.mxu0 0
        %1000 = vmatpush1.bf16.msra.mxu0 %v857
        %1001 = vmatprep.subr.bf16.mxu0 0
        %1002 = vmatpush1.bf16.msra.mxu0 %v858
        %1003 = vmatprep.mubr.bf16.mxu0 %v452
        %1004 = vmatmul.mubr.bf16.gmra.mrb[0].mxu0 %v451
        %v1005 = vpop.f32.mrb[0].mxu0
        %v1006 = vadd.f32 0.0, %v1005
        %v1007 = vpop.f32.mrb[0].mxu0
        %v1008 = vpop.f32.mrb[0].mxu0
        %v1009 = vpop.f32.mrb[0].mxu0
        %1010 = vdwg.mxu0
        %1011 = vmatprep.subr.bf16.mxu0 0
        %1012 = vmatpush1.bf16.msra.mxu0 %v859
        %1013 = vmatprep.subr.bf16.mxu0 0
        %1014 = vmatpush1.bf16.msra.mxu0 %v860
        %1015 = vmatprep.subr.bf16.mxu0 0
        %1016 = vmatpush1.bf16.msra.mxu0 %v861
        %1017 = vmatprep.subr.bf16.mxu0 0
        %1018 = vmatpush1.bf16.msra.mxu0 %v862
        %1019 = vmatprep.subr.bf16.mxu0 0
        %1020 = vmatpush1.bf16.msra.mxu0 %v863
        %1021 = vmatprep.subr.bf16.mxu0 0
        %1022 = vmatpush1.bf16.msra.mxu0 %v864
        %1023 = vmatprep.subr.bf16.mxu0 0
        %1024 = vmatpush1.bf16.msra.mxu0 %v865
        %1025 = vmatprep.subr.bf16.mxu0 0
        %1026 = vmatpush1.bf16.msra.mxu0 %v866
        %1027 = vmatprep.subr.bf16.mxu0 0
        %1028 = vmatpush1.bf16.msra.mxu0 %v867
        %1029 = vmatprep.subr.bf16.mxu0 0
        %1030 = vmatpush1.bf16.msra.mxu0 %v868
        %1031 = vmatprep.subr.bf16.mxu0 0
        %1032 = vmatpush1.bf16.msra.mxu0 %v869
        %1033 = vmatprep.subr.bf16.mxu0 0
        %1034 = vmatpush1.bf16.msra.mxu0 %v870
        %1035 = vmatprep.subr.bf16.mxu0 0
        %1036 = vmatpush1.bf16.msra.mxu0 %v871
        %1037 = vmatprep.subr.bf16.mxu0 0
        %1038 = vmatpush1.bf16.msra.mxu0 %v872
        %1039 = vmatprep.subr.bf16.mxu0 0
        %1040 = vmatpush1.bf16.msra.mxu0 %v873
        %1041 = vmatprep.subr.bf16.mxu0 0
        %1042 = vmatpush1.bf16.msra.mxu0 %v874
        %1043 = vmatprep.mubr.bf16.mxu0 %v454
        %1044 = vmatmul.mubr.bf16.gmra.mrb[0].mxu0 %v453
        %v1045 = vpop.f32.mrb[0].mxu0
        %v1046 = vadd.f32 %v1006, %v1045
        %v1047 = vpop.f32.mrb[0].mxu0
        %v1048 = vpop.f32.mrb[0].mxu0
        %v1049 = vpop.f32.mrb[0].mxu0
        %1050 = vdwg.mxu0
        %1051 = vmatprep.subr.bf16.mxu0 0
        %1052 = vmatpush1.bf16.msra.mxu0 %v875
        %1053 = vmatprep.subr.bf16.mxu0 0
        %1054 = vmatpush1.bf16.msra.mxu0 %v876
        %1055 = vmatprep.subr.bf16.mxu0 0
        %1056 = vmatpush1.bf16.msra.mxu0 %v877
        %1057 = vmatprep.subr.bf16.mxu0 0
        %1058 = vmatpush1.bf16.msra.mxu0 %v878
        %1059 = vmatprep.subr.bf16.mxu0 0
        %1060 = vmatpush1.bf16.msra.mxu0 %v879
        %1061 = vmatprep.subr.bf16.mxu0 0
        %1062 = vmatpush1.bf16.msra.mxu0 %v880
        %1063 = vmatprep.subr.bf16.mxu0 0
        %1064 = vmatpush1.bf16.msra.mxu0 %v881
        %1065 = vmatprep.subr.bf16.mxu0 0
        %1066 = vmatpush1.bf16.msra.mxu0 %v882
        %1067 = vmatprep.subr.bf16.mxu0 0
        %1068 = vmatpush1.bf16.msra.mxu0 %v883
        %1069 = vmatprep.subr.bf16.mxu0 0
        %1070 = vmatpush1.bf16.msra.mxu0 %v884
        %1071 = vmatprep.subr.bf16.mxu0 0
        %1072 = vmatpush1.bf16.msra.mxu0 %v885
        %1073 = vmatprep.subr.bf16.mxu0 0
        %1074 = vmatpush1.bf16.msra.mxu0 %v886
        %1075 = vmatprep.subr.bf16.mxu0 0
        %1076 = vmatpush1.bf16.msra.mxu0 %v887
        %1077 = vmatprep.subr.bf16.mxu0 0
        %1078 = vmatpush1.bf16.msra.mxu0 %v888
        %1079 = vmatprep.subr.bf16.mxu0 0
        %1080 = vmatpush1.bf16.msra.mxu0 %v889
        %1081 = vmatprep.subr.bf16.mxu0 0
        %1082 = vmatpush1.bf16.msra.mxu0 %v890
        %1083 = vmatprep.mubr.bf16.mxu0 %v456
        %1084 = vmatmul.mubr.bf16.gmra.mrb[0].mxu0 %v455
        %v1085 = vpop.f32.mrb[0].mxu0
        %v1086 = vadd.f32 %v1046, %v1085
        %v1087 = vpop.f32.mrb[0].mxu0
        %v1088 = vpop.f32.mrb[0].mxu0
        %v1089 = vpop.f32.mrb[0].mxu0
        %1090 = vdwg.mxu0
        %1091 = vmatprep.subr.bf16.mxu0 0
        %1092 = vmatpush1.bf16.msra.mxu0 %v891
        %1093 = vmatprep.subr.bf16.mxu0 0
        %1094 = vmatpush1.bf16.msra.mxu0 %v892
        %1095 = vmatprep.subr.bf16.mxu0 0
        %1096 = vmatpush1.bf16.msra.mxu0 %v893
        %1097 = vmatprep.subr.bf16.mxu0 0
        %1098 = vmatpush1.bf16.msra.mxu0 %v894
        %1099 = vmatprep.subr.bf16.mxu0 0
        %1100 = vmatpush1.bf16.msra.mxu0 %v895
        %1101 = vmatprep.subr.bf16.mxu0 0
        %1102 = vmatpush1.bf16.msra.mxu0 %v896
        %1103 = vmatprep.subr.bf16.mxu0 0
        %1104 = vmatpush1.bf16.msra.mxu0 %v897
        %1105 = vmatprep.subr.bf16.mxu0 0
        %1106 = vmatpush1.bf16.msra.mxu0 %v898
        %1107 = vmatprep.subr.bf16.mxu0 0
        %1108 = vmatpush1.bf16.msra.mxu0 %v899
        %1109 = vmatprep.subr.bf16.mxu0 0
        %1110 = vmatpush1.bf16.msra.mxu0 %v900
        %1111 = vmatprep.subr.bf16.mxu0 0
        %1112 = vmatpush1.bf16.msra.mxu0 %v901
        %1113 = vmatprep.subr.bf16.mxu0 0
        %1114 = vmatpush1.bf16.msra.mxu0 %v902
        %1115 = vmatprep.subr.bf16.mxu0 0
        %1116 = vmatpush1.bf16.msra.mxu0 %v903
        %1117 = vmatprep.subr.bf16.mxu0 0
        %1118 = vmatpush1.bf16.msra.mxu0 %v904
        %1119 = vmatprep.subr.bf16.mxu0 0
        %1120 = vmatpush1.bf16.msra.mxu0 %v905
        %1121 = vmatprep.subr.bf16.mxu0 0
        %1122 = vmatpush1.bf16.msra.mxu0 %v906
        %1123 = vmatprep.mubr.bf16.mxu0 %v458
        %1124 = vmatmul.mubr.bf16.gmra.mrb[0].mxu0 %v457
        %v1125 = vpop.f32.mrb[0].mxu0
        %v1126 = vadd.f32 %v1086, %v1125
        %v1127 = vpop.f32.mrb[0].mxu0
        %v1128 = vpop.f32.mrb[0].mxu0
        %v1129 = vpop.f32.mrb[0].mxu0
        %1130 = vdwg.mxu0
        %v1131 = vadd.f32 %v442, %v1126
        %1132 = vst [vmem:[#allocation2] sm:$0xff] %v1131
        // Predicated region
        $region49: #{image_encoder_forward.1} parent=43 // pred_check
          %p1133 = pneg %p318
        $region50: #{image_encoder_forward.1} parent=43 // pred_check_branch
          %1135 = sbr.rel (%p1133) target = $region52
        $region51: #{image_encoder_forward.1} parent=43 // pred_region
          %v1136 = vld [vmem:[#allocation2] sm:$0xff]
          %v1137 = vmax.f32 %v1136, 0.0
          %v1138 = vpack.c.bf16 %v1137, %v1137
          %v1139 = vld [vmem:[%s4 + $0x40] sm:$0xf]
          %v1140 = vld [vmem:[%s4 + $0x44] sm:$0xf]
          %v1141 = vld [vmem:[%s4 + $0x48] sm:$0xf]
          %v1142 = vld [vmem:[%s4 + $0x4c] sm:$0xf]
          %v1143 = vld [vmem:[%s4 + $0x50] sm:$0xf]
          %v1144 = vld [vmem:[%s4 + $0x54] sm:$0xf]
          %v1145 = vld [vmem:[%s4 + $0x58] sm:$0xf]
          %v1146 = vld [vmem:[%s4 + $0x5c] sm:$0xf]
          %v1147 = vld [vmem:[%s4 + $0x60] sm:$0xf]
          %v1148 = vld [vmem:[%s4 + $0x64] sm:$0xf]
          %v1149 = vld [vmem:[%s4 + $0x68] sm:$0xf]
          %v1150 = vld [vmem:[%s4 + $0x6c] sm:$0xf]
          %v1151 = vld [vmem:[%s4 + $0x70] sm:$0xf]
          %v1152 = vld [vmem:[%s4 + $0x74] sm:$0xf]
          %v1153 = vld [vmem:[%s4 + $0x78] sm:$0xf]
          %v1154 = vld [vmem:[%s4 + $0x7c] sm:$0xf]
          %v1171 = vunpack.c.l.b16 %v1139
          %v1172 = vunpack.c.l.b16 %v1140
          %v1173 = vunpack.c.l.b16 %v1141
          %v1174 = vunpack.c.l.b16 %v1142
          %v1175 = vunpack.c.l.b16 %v1143
          %v1176 = vunpack.c.l.b16 %v1144
          %v1177 = vunpack.c.l.b16 %v1145
          %v1178 = vunpack.c.l.b16 %v1146
          %v1179 = vunpack.c.l.b16 %v1147
          %v1180 = vunpack.c.l.b16 %v1148
          %v1181 = vunpack.c.l.b16 %v1149
          %v1182 = vunpack.c.l.b16 %v1150
          %v1183 = vunpack.c.l.b16 %v1151
          %v1184 = vunpack.c.l.b16 %v1152
          %v1185 = vunpack.c.l.b16 %v1153
          %v1186 = vunpack.c.l.b16 %v1154
          %v1187 = vpack.c.b16 %v1172, %v1171
          %v1188 = vpack.c.b16 %v1174, %v1173
          %v1189 = vpack.c.b16 %v1176, %v1175
          %v1190 = vpack.c.b16 %v1178, %v1177
          %v1191 = vpack.c.b16 %v1180, %v1179
          %v1192 = vpack.c.b16 %v1182, %v1181
          %v1193 = vpack.c.b16 %v1184, %v1183
          %v1194 = vpack.c.b16 %v1186, %v1185
          %1203 = vmatprep.subr.bf16.mxu0 0
          %1204 = vmatpush1.bf16.msra.mxu0 %v1187
          %1205 = vmatprep.subr.bf16.mxu0 0
          %1206 = vmatpush1.bf16.msra.mxu0 %v1188
          %1207 = vmatprep.subr.bf16.mxu0 0
          %1208 = vmatpush1.bf16.msra.mxu0 %v1189
          %1209 = vmatprep.subr.bf16.mxu0 0
          %1210 = vmatpush1.bf16.msra.mxu0 %v1190
          %1211 = vmatprep.subr.bf16.mxu0 0
          %1212 = vmatpush1.bf16.msra.mxu0 %v1191
          %1213 = vmatprep.subr.bf16.mxu0 0
          %1214 = vmatpush1.bf16.msra.mxu0 %v1192
          %1215 = vmatprep.subr.bf16.mxu0 0
          %1216 = vmatpush1.bf16.msra.mxu0 %v1193
          %1217 = vmatprep.subr.bf16.mxu0 0
          %1218 = vmatpush1.bf16.msra.mxu0 %v1194
          %1219 = vmatprep.subr.bf16.mxu0 0
          %1220 = vmatpush1.bf16.msra.mxu0 0
          %1221 = vmatprep.subr.bf16.mxu0 0
          %1222 = vmatpush1.bf16.msra.mxu0 0
          %1223 = vmatprep.subr.bf16.mxu0 0
          %1224 = vmatpush1.bf16.msra.mxu0 0
          %1225 = vmatprep.subr.bf16.mxu0 0
          %1226 = vmatpush1.bf16.msra.mxu0 0
          %1227 = vmatprep.subr.bf16.mxu0 0
          %1228 = vmatpush1.bf16.msra.mxu0 0
          %1229 = vmatprep.subr.bf16.mxu0 0
          %1230 = vmatpush1.bf16.msra.mxu0 0
          %1231 = vmatprep.subr.bf16.mxu0 0
          %1232 = vmatpush1.bf16.msra.mxu0 0
          %1233 = vmatprep.subr.bf16.mxu0 0
          %1234 = vmatpush1.bf16.msra.mxu0 0
          %1235 = vmatprep.mubr.bf16.mxu0 0
          %1236 = vmatmul.mubr.bf16.gmra.mrb[0].mxu0 %v1138
          %v1237 = vpop.f32.mrb[0].mxu0
          %v1238 = vadd.f32 0.0, %v1237
          %v1239 = vpop.f32.mrb[0].mxu0
          %v1240 = vpop.f32.mrb[0].mxu0
          %v1241 = vpop.f32.mrb[0].mxu0
          %1242 = vdwg.mxu0
          %v1243 = vld [vmem:[%s296] sm:$0xff]
          %v1244 = vadd.f32 %v1243, %v1238
          %1245 = vadd.xlane.f32.xlu0 %v1244
          %v1246 = vpop.xlane.xlu0 %1245
          %v1247 = vrcp.pop 128.0
          %v1248 = vmul.f32 %v1246, %v1247
          %v1249 = vsub.f32 %v1244, %v1248
          %v1250 = vmul.f32 %v1249, %v1249
          %1251 = vadd.xlane.f32.xlu0 %v1250
          %v1252 = vpop.xlane.xlu0 %1251
          %v1253 = vmul.f32 %v1252, %v1247
          %v1254 = vadd.f32 %v1253, 1e-05
          %v1255 = vrsqrt.pop %v1254
          %v1256 = vmul.f32 %v1249, %v1255
          %v1257 = vld [vmem:[%s5 + $0x1] sm:$0x1]
          %v1258 = vlaneseq
          %v1259 = vshrl.u32 %v1258, 7
          %v1260 = vsub.s32 0, %v1259
          %v1261 = vrot.slane %v1257, %v1260
          %v1262 = vmul.f32 %v1256, %v1261
          %v1263 = vld [vmem:[%s5 + $0x2] sm:$0x1]
          %v1264 = vlaneseq
          %v1265 = vshrl.u32 %v1264, 7
          %v1266 = vsub.s32 0, %v1265
          %v1267 = vrot.slane %v1263, %v1266
          %v1268 = vadd.f32 %v1262, %v1267
          %1269 = vst [vmem:[%s296] sm:$0xff] %v1268
        $region52: #{image_encoder_forward.1} parent=43 // pred_fallthru
          _
        %s1270 = sand.u32 %s183, 1
        %s1271 = scalar_lea.sflag [#allocation4], %s1270
        %s1272 = sand.u32 %s183, 1
        %s1273 = smul.addr %s1272, 8
        %s1274 = scalar_lea.vmem [#allocation3], %s1273
        // Predicated region
        $region53: #{image_encoder_forward.1} parent=43 // pred_check
          %p1275 = pneg %p193
        $region54: #{image_encoder_forward.1} parent=43 // pred_check_branch
          %1277 = sbr.rel (%p1275) target = $region56
        $region55: #{image_encoder_forward.1} parent=43 // pred_region
          %s1279 = ssub.s32 128, 128
          %1280 = vsyncadd %s1271, %s1279
          %s1281 = smul.addr %s24, 128
          %s1282 = scalar_lea.hbm %s6, %s1281
          %s1284 = sshll.u32 %s1274, 4
          %s1285 = int_to_ptr.vmem [resolvable:$true] %s1284
          %1287 = dma.vmem_to_hbm [thread:$0]  %s1285, 128, %s1282, %s1271
        $region56: #{image_encoder_forward.1} parent=43 // pred_fallthru
          _
      $region44: #{image_encoder_forward.1} parent=5 // pred_fallthru
        _
      %p1288 = scmp.le.s32.totalorder 2, %s15
      // Predicated region
      $region57: #{image_encoder_forward.1} parent=5 // pred_check
        %p1289 = pneg %p1288
      $region58: #{image_encoder_forward.1} parent=5 // pred_check_branch
        %1291 = sbr.rel (%p1289) target = $region60
      $region59: #{image_encoder_forward.1} parent=5 // pred_region
        %s1292 = ssub.s32 %s15, 2
        // Predicated region
        $region61: #{image_encoder_forward.1} parent=59 // pred_check
          %p1293 = pneg %p199
        $region62: #{image_encoder_forward.1} parent=59 // pred_check_branch
          %1295 = sbr.rel (%p1293) target = $region64
        $region63: #{image_encoder_forward.1} parent=59 // pred_region
          %s1296 = sand.u32 %s184, 1
          %s1297 = scalar_lea.sflag [#allocation4], %s1296
          %s1298 = sand.u32 %s184, 1
          %s1299 = smul.addr %s1298, 8
          %s1300 = scalar_lea.vmem [#allocation3], %s1299
          %1301 = dma.done %s1297, 128
        $region64: #{image_encoder_forward.1} parent=59 // pred_fallthru
          _
      $region60: #{image_encoder_forward.1} parent=5 // pred_fallthru
        _
    $region6: #{image_encoder_forward.1} parent=1 // loop_footer
      %s19 = sadd.s32 1, %s15
    $region7: #{image_encoder_forward.1} parent=1 // loop_footer_branch
      %14 = sbr.rel target = $region3
    $region8: #{image_encoder_forward.1} parent=1 // loop_exit
      _
    %1302 = vsyncpa [#allocation4], 1
    %s1303 = scalar_lea.sflag [#allocation4], 1
    %1304 = vsyncpa %s1303, 1

</llo_original>
